<compile_context>
chip_gen: v6e
topology: v6e:2x2x1
jax: 0.10.0
libtpu: 0.0.40
codegen_flags: <defaults>
</compile_context>

<pallas_src>
import numpy as np
import jax
import jax.numpy as jnp
from jax import lax
from jax.experimental import pallas as pl
from jax.experimental.pallas import tpu as pltpu

# Small, module-consistent sizes (stand-ins for batch_size / seq / embed / hidden).
BATCH = 8
SEQ = 8
EMBED = 16
HIDDEN = 32

# PyTorch nn.LSTM gate order in the stored weights, and our grouped order
# (g last so the tanh slice is one contiguous column block).
_GATE_IDX = {"i": 0, "f": 1, "g": 2, "o": 3}
_GROUPED_ORDER = ("i", "f", "o", "g")


def _group_gate_cols(w, H):
    """(X, 4H) in PyTorch gate order [i,f,g,o] -> (X, 4H) in order [i,f,o,g]."""
    return jnp.concatenate(
        [w[:, _GATE_IDX[g] * H:(_GATE_IDX[g] + 1) * H] for g in _GROUPED_ORDER],
        axis=1)


def _interleave_dirs(wf, wb):
    """Interleave per-gate column blocks of two (X, 4H) mats -> (X, 8H):
    [i_f i_b | f_f f_b | o_f o_b | g_f g_b]."""
    H = wf.shape[1] // 4
    parts = []
    for k in range(4):
        parts.append(wf[:, k * H:(k + 1) * H])
        parts.append(wb[:, k * H:(k + 1) * H])
    return jnp.concatenate(parts, axis=1)


def _head_selector(B):
    """(2B, B) 0/1 matrix: row r (r<B) picks h_all row (2r)%B, row B+r picks
    (2r+1)%B.  Together with a half-column select this reproduces PyTorch's
    row-major hn.reshape(B, 2H) of the (2, B, H) final-hidden tensor."""
    sel = np.zeros((2 * B, B), np.float32)
    for r in range(B):
        sel[r, (2 * r) % B] = 1.0
        sel[B + r, (2 * r + 1) % B] = 1.0
    return jnp.asarray(sel)


def _bilstm_head_kernel(xcat_ref, h0_ref, c0_ref, wx_ref, wh_ref, b_ref,
                        sel_ref, wout_ref, out_ref, xg_ref):
    """Fused biLSTM recurrence (merged fwd/bwd state) + Linear head + tanh.

    xcat_ref: (T*B, 2E) bf16   [x_t | x_{T-1-t}] per time row block
    h0_ref:   (B, 2H)  f32     [h0_fwd | h0_bwd]
    c0_ref:   (B, 2H)  f32     [c0_fwd | c0_bwd]
    wx_ref:   (2E, 8H) bf16    block-diag input weights, grouped gate columns
    wh_ref:   (2H, 8H) bf16    block-diag recurrent weights, grouped columns
    b_ref:    (1, 8H)  f32     combined bias (b_ih + b_hh), grouped columns
    sel_ref:  (2B, B)  f32     head row selector (see _head_selector)
    wout_ref: (2H, 3)  f32     Linear(2H, 3, bias=False) weight, transposed
    out_ref:  (B, 3)   f32     tanh(hn_flat @ W_out)
    xg_ref:   (T*B, 8H) f32    scratch: hoisted input-gate contributions
    """
    TB, _ = xg_ref.shape
    B, H2 = h0_ref.shape          # H2 = 2H
    H = H2 // 2
    T = TB // B
    G6 = 3 * H2                   # width of the sigmoid (i|f|o) slice

    # ---- Hoisted input projection for both directions (bwd already time-
    # reversed host-side): one bf16 MXU matmul, f32 accumulation, bias once.
    xg_ref[...] = (jnp.dot(xcat_ref[...], wx_ref[...],
                           preferred_element_type=jnp.float32)
                   + b_ref[...])

    wh = wh_ref[...]              # (2H, 8H) bf16, resident across the loop

    # ---- Merged forward/backward recurrence on the (B, 2H) [h_f|h_b] state.
    def step(t, carry):
        h_all, c_all = carry
        off = pl.multiple_of(t * B, B)
        g = xg_ref[pl.ds(off, B), :] + jnp.dot(
            h_all.astype(jnp.bfloat16), wh, preferred_element_type=jnp.float32)
        s = jax.nn.sigmoid(g[:, :G6])          # one wide EUP pass (i|f|o)
        i_all = s[:, 0 * H2:1 * H2]
        f_all = s[:, 1 * H2:2 * H2]
        o_all = s[:, 2 * H2:3 * H2]
        g_all = jnp.tanh(g[:, G6:])            # (B, 2H) tanh (g gate)
        c_new = f_all * c_all + i_all * g_all
        h_new = o_all * jnp.tanh(c_new)
        return h_new, c_new

    h_all, _ = lax.fori_loop(0, T, step, (h0_ref[...], c0_ref[...]),
                             unroll=True)

    # ---- Fused head: reproduce torch hn.reshape(B, 2H) (row-major flatten of
    # the (2, B, H) tensor) with one selector matmul + two row-masked selects,
    # then a single W_out matmul + tanh.
    G = jnp.dot(sel_ref[...], h_all, preferred_element_type=jnp.float32)  # (2B, 2H)
    half = lax.broadcasted_iota(jnp.int32, (B, 1), 0) < (B // 2)
    top = jnp.where(half, G[:B, :H], G[:B, H:])     # hn_flat[:, :H]
    bot = jnp.where(half, G[B:, :H], G[B:, H:])     # hn_flat[:, H:]
    hn_flat = jnp.concatenate([top, bot], axis=1)   # (B, 2H)
    out_ref[...] = jnp.tanh(jnp.dot(hn_flat, wout_ref[...],
                                    preferred_element_type=jnp.float32))


def init_params(key, embedding_dim, hidden_dim):
    """Deterministic synthetic parameters matching nn.LSTM / nn.Linear shapes."""
    ks = jax.random.split(key, 10)
    scale = 1.0 / jnp.sqrt(hidden_dim)

    def u(k, shape):
        return jax.random.uniform(k, shape, jnp.float32, -scale, scale)

    H4 = 4 * hidden_dim
    return {
        # stored transposed: (E, 4H) / (H, 4H), PyTorch gate order [i, f, g, o]
        "wih_f": u(ks[0], (embedding_dim, H4)),
        "whh_f": u(ks[1], (hidden_dim, H4)),
        "b_f": u(ks[2], (1, H4)) + u(ks[3], (1, H4)),   # bias_ih + bias_hh
        "wih_b": u(ks[4], (embedding_dim, H4)),
        "whh_b": u(ks[5], (hidden_dim, H4)),
        "b_b": u(ks[6], (1, H4)) + u(ks[7], (1, H4)),
        # self.W: Linear(2H, 3, bias=False), stored transposed as (2H, 3)
        "w_out": (1.0 / jnp.sqrt(2 * hidden_dim)) *
                 jax.random.uniform(ks[8], (2 * hidden_dim, 3), jnp.float32,
                                    -1.0, 1.0),
    }


def lstm_twitter_forward(x, h0, c0, params):
    """Equivalent of LSTM_twitter.forward(x, (h0, c0)) — one fused pallas_call."""
    B, T, E = x.shape
    H = h0.shape[-1]
    assert B % 2 == 0, "head flatten trick assumes even batch"

    # --- Host-side weight regrouping into the merged/grouped layout.
    gf_x = _group_gate_cols(params["wih_f"], H)
    gb_x = _group_gate_cols(params["wih_b"], H)
    gf_h = _group_gate_cols(params["whh_f"], H)
    gb_h = _group_gate_cols(params["whh_b"], H)
    bf = _group_gate_cols(params["b_f"], H)
    bb = _group_gate_cols(params["b_b"], H)

    # Block-diagonal x-projection weights: rows [0:E] act on x_t (fwd columns),
    # rows [E:2E] act on the time-reversed copy (bwd columns).
    wx_blk = jnp.concatenate(
        [_interleave_dirs(gf_x, jnp.zeros_like(gf_x)),
         _interleave_dirs(jnp.zeros_like(gb_x), gb_x)], axis=0)       # (2E, 8H)
    # Block-diagonal recurrent weights for the merged [h_f | h_b] state.
    wh_blk = jnp.concatenate(
        [_interleave_dirs(gf_h, jnp.zeros_like(gf_h)),
         _interleave_dirs(jnp.zeros_like(gb_h), gb_h)], axis=0)       # (2H, 8H)
    b_grp = _interleave_dirs(bf, bb)                                  # (1, 8H)

    # Time-major x plus its time-reversed copy, concatenated on features so the
    # whole input projection (both directions) is ONE in-kernel MXU matmul.
    x_tm = jnp.transpose(x, (1, 0, 2)).astype(jnp.float32)            # (T, B, E)
    xcat = jnp.concatenate([x_tm, x_tm[::-1]], axis=-1).reshape(T * B, 2 * E)

    h0_cat = jnp.concatenate([h0[0], h0[1]], axis=-1).astype(jnp.float32)
    c0_cat = jnp.concatenate([c0[0], c0[1]], axis=-1).astype(jnp.float32)
    sel = _head_selector(B)

    vmem = pl.BlockSpec(memory_space=pltpu.MemorySpace.VMEM)

    out = pl.pallas_call(
        _bilstm_head_kernel,
        out_shape=jax.ShapeDtypeStruct((B, 3), jnp.float32),
        in_specs=[vmem] * 8,
        out_specs=vmem,
        scratch_shapes=[pltpu.VMEM((T * B, 8 * H), jnp.float32)],
    )(xcat.astype(jnp.bfloat16), h0_cat, c0_cat,
      wx_blk.astype(jnp.bfloat16), wh_blk.astype(jnp.bfloat16), b_grp,
      sel, params["w_out"])
    return out


# ---------------------------------------------------------------------------
# Pure-JAX f32 reference (same math as the PyTorch module) for correctness.
# ---------------------------------------------------------------------------
def _reference_forward(x, h0, c0, params):
    H = h0.shape[-1]

    def cell(x_t, h, c, wih, whh, b):
        gates = x_t @ wih + h @ whh + b
        i = jax.nn.sigmoid(gates[:, 0 * H:1 * H])
        f = jax.nn.sigmoid(gates[:, 1 * H:2 * H])
        g = jnp.tanh(gates[:, 2 * H:3 * H])
        o = jax.nn.sigmoid(gates[:, 3 * H:4 * H])
        c_new = f * c + i * g
        return o * jnp.tanh(c_new), c_new

    T = x.shape[1]
    h_f, c_f = h0[0], c0[0]
    for t in range(T):
        h_f, c_f = cell(x[:, t], h_f, c_f,
                        params["wih_f"], params["whh_f"], params["b_f"])
    h_b, c_b = h0[1], c0[1]
    for t in reversed(range(T)):
        h_b, c_b = cell(x[:, t], h_b, c_b,
                        params["wih_b"], params["whh_b"], params["b_b"])
    hn = jnp.stack([h_f, h_b], axis=0)
    hn_flat = hn.reshape(x.shape[0], 2 * H)   # PyTorch row-major flatten
    return jnp.tanh(hn_flat @ params["w_out"])


if __name__ == "__main__":
    key = jax.random.PRNGKey(0)
    k_x, k_p = jax.random.split(key)

    x = jax.random.normal(k_x, (BATCH, SEQ, EMBED), jnp.float32)
    h0 = jnp.zeros((2, BATCH, HIDDEN), jnp.float32)   # init_hidden()
    c0 = jnp.zeros((2, BATCH, HIDDEN), jnp.float32)
    params = init_params(k_p, EMBED, HIDDEN)

    out = lstm_twitter_forward(x, h0, c0, params)
    out = jax.block_until_ready(out)

    ref = _reference_forward(x, h0, c0, params)
    assert out.shape == (BATCH, 3)
    # bf16 MXU operands with f32 accumulation -> relaxed tolerance.
    assert jnp.allclose(out, ref, rtol=2e-2, atol=2e-2), "mismatch vs reference"

    print("KERNEL_OK")
</pallas_src>

<mosaic_0001>
module attributes {stable_mosaic.version = 11 : i64} {
  func.func @_bilstm_head_kernel(%arg0: memref<64x32xbf16, #tpu.memory_space<vmem>>, %arg1: memref<8x64xf32, #tpu.memory_space<vmem>>, %arg2: memref<8x64xf32, #tpu.memory_space<vmem>>, %arg3: memref<32x256xbf16, #tpu.memory_space<vmem>>, %arg4: memref<64x256xbf16, #tpu.memory_space<vmem>>, %arg5: memref<1x256xf32, #tpu.memory_space<vmem>>, %arg6: memref<16x8xf32, #tpu.memory_space<vmem>>, %arg7: memref<64x3xf32, #tpu.memory_space<vmem>>, %arg8: memref<8x3xf32, #tpu.memory_space<vmem>>, %arg9: memref<64x256xf32, #tpu.memory_space<vmem>>) attributes {dimension_semantics = [], scalar_prefetch = 0 : i64, scratch_operands = 1 : i64, tpu.core_type = #tpu.core_type<tc>} {
    %c0 = arith.constant 0 : index
    %c0_0 = arith.constant 0 : index
    %0 = vector.load %arg0[%c0, %c0_0] : memref<64x32xbf16, #tpu.memory_space<vmem>>, vector<64x32xbf16>
    %c0_1 = arith.constant 0 : index
    %c0_2 = arith.constant 0 : index
    %1 = vector.load %arg3[%c0_1, %c0_2] : memref<32x256xbf16, #tpu.memory_space<vmem>>, vector<32x256xbf16>
    %cst = arith.constant dense<0.000000e+00> : vector<64x256xf32>
    %2 = tpu.matmul %0, %1, %cst {dimension_numbers = #tpu.dot_dimension_numbers<[1], [0], [0], [1], [0, 0, 1, 1], [], []>} : vector<64x32xbf16>, vector<32x256xbf16>, vector<64x256xf32> -> vector<64x256xf32>
    %c0_3 = arith.constant 0 : index
    %c0_4 = arith.constant 0 : index
    %3 = vector.load %arg5[%c0_3, %c0_4] : memref<1x256xf32, #tpu.memory_space<vmem>>, vector<1x256xf32>
    %4 = vector.broadcast %3 : vector<1x256xf32> to vector<64x256xf32>
    %5 = arith.addf %2, %4 : vector<64x256xf32>
    %c0_5 = arith.constant 0 : index
    %c0_6 = arith.constant 0 : index
    %6 = vector.load %arg9[%c0_5, %c0_6] : memref<64x256xf32, #tpu.memory_space<vmem>>, vector<64x256xf32>
    tpu.vector_store %arg9[%c0_5, %c0_6], %5 {strides = array<i32>} : memref<64x256xf32, #tpu.memory_space<vmem>>, vector<64x256xf32>,
    %c0_7 = arith.constant 0 : index
    %c0_8 = arith.constant 0 : index
    %7 = vector.load %arg4[%c0_7, %c0_8] : memref<64x256xbf16, #tpu.memory_space<vmem>>, vector<64x256xbf16>
    %c0_9 = arith.constant 0 : index
    %c0_10 = arith.constant 0 : index
    %8 = vector.load %arg1[%c0_9, %c0_10] : memref<8x64xf32, #tpu.memory_space<vmem>>, vector<8x64xf32>
    %c0_11 = arith.constant 0 : index
    %c0_12 = arith.constant 0 : index
    %9 = vector.load %arg2[%c0_11, %c0_12] : memref<8x64xf32, #tpu.memory_space<vmem>>, vector<8x64xf32>
    %c0_i32 = arith.constant 0 : i32
    %c8_i32 = arith.constant 8 : i32
    %10 = arith.muli %c0_i32, %c8_i32 : i32
    %11 = tpu.assume_multiple %10, 8 : i32
    %12 = arith.index_cast %11 : i32 to index
    %c0_13 = arith.constant 0 : index
    %13 = vector.load %arg9[%12, %c0_13] : memref<64x256xf32, #tpu.memory_space<vmem>>, vector<8x256xf32>
    %14 = arith.truncf %8 : vector<8x64xf32> to vector<8x64xbf16>
    %cst_14 = arith.constant dense<0.000000e+00> : vector<8x256xf32>
    %15 = tpu.matmul %14, %7, %cst_14 {dimension_numbers = #tpu.dot_dimension_numbers<[1], [0], [0], [1], [0, 0, 1, 1], [], []>} : vector<8x64xbf16>, vector<64x256xbf16>, vector<8x256xf32> -> vector<8x256xf32>
    %16 = arith.addf %13, %15 : vector<8x256xf32>
    %17 = vector.extract_strided_slice %16 {offsets = [0, 0], sizes = [8, 192], strides = [1, 1]} : vector<8x256xf32> to vector<8x192xf32>
    %18 = arith.negf %17 : vector<8x192xf32>
    %19 = math.exp %18 : vector<8x192xf32>
    %cst_15 = arith.constant 1.000000e+00 : f32
    %20 = vector.broadcast %cst_15 : f32 to vector<8x192xf32>
    %21 = arith.addf %20, %19 : vector<8x192xf32>
    %22 = arith.divf %20, %21 : vector<8x192xf32>
    %23 = vector.extract_strided_slice %22 {offsets = [0, 0], sizes = [8, 64], strides = [1, 1]} : vector<8x192xf32> to vector<8x64xf32>
    %24 = vector.extract_strided_slice %22 {offsets = [0, 64], sizes = [8, 64], strides = [1, 1]} : vector<8x192xf32> to vector<8x64xf32>
    %25 = vector.extract_strided_slice %22 {offsets = [0, 128], sizes = [8, 64], strides = [1, 1]} : vector<8x192xf32> to vector<8x64xf32>
    %26 = vector.extract_strided_slice %16 {offsets = [0, 192], sizes = [8, 64], strides = [1, 1]} : vector<8x256xf32> to vector<8x64xf32>
    %27 = math.tanh %26 : vector<8x64xf32>
    %28 = arith.mulf %24, %9 : vector<8x64xf32>
    %29 = arith.mulf %23, %27 : vector<8x64xf32>
    %30 = arith.addf %28, %29 : vector<8x64xf32>
    %31 = math.tanh %30 : vector<8x64xf32>
    %32 = arith.mulf %25, %31 : vector<8x64xf32>
    %c1_i32 = arith.constant 1 : i32
    %c8_i32_16 = arith.constant 8 : i32
    %33 = arith.muli %c1_i32, %c8_i32_16 : i32
    %34 = tpu.assume_multiple %33, 8 : i32
    %35 = arith.index_cast %34 : i32 to index
    %c0_17 = arith.constant 0 : index
    %36 = vector.load %arg9[%35, %c0_17] : memref<64x256xf32, #tpu.memory_space<vmem>>, vector<8x256xf32>
    %37 = arith.truncf %32 : vector<8x64xf32> to vector<8x64xbf16>
    %cst_18 = arith.constant dense<0.000000e+00> : vector<8x256xf32>
    %38 = tpu.matmul %37, %7, %cst_18 {dimension_numbers = #tpu.dot_dimension_numbers<[1], [0], [0], [1], [0, 0, 1, 1], [], []>} : vector<8x64xbf16>, vector<64x256xbf16>, vector<8x256xf32> -> vector<8x256xf32>
    %39 = arith.addf %36, %38 : vector<8x256xf32>
    %40 = vector.extract_strided_slice %39 {offsets = [0, 0], sizes = [8, 192], strides = [1, 1]} : vector<8x256xf32> to vector<8x192xf32>
    %41 = arith.negf %40 : vector<8x192xf32>
    %42 = math.exp %41 : vector<8x192xf32>
    %cst_19 = arith.constant 1.000000e+00 : f32
    %43 = vector.broadcast %cst_19 : f32 to vector<8x192xf32>
    %44 = arith.addf %43, %42 : vector<8x192xf32>
    %45 = arith.divf %43, %44 : vector<8x192xf32>
    %46 = vector.extract_strided_slice %45 {offsets = [0, 0], sizes = [8, 64], strides = [1, 1]} : vector<8x192xf32> to vector<8x64xf32>
    %47 = vector.extract_strided_slice %45 {offsets = [0, 64], sizes = [8, 64], strides = [1, 1]} : vector<8x192xf32> to vector<8x64xf32>
    %48 = vector.extract_strided_slice %45 {offsets = [0, 128], sizes = [8, 64], strides = [1, 1]} : vector<8x192xf32> to vector<8x64xf32>
    %49 = vector.extract_strided_slice %39 {offsets = [0, 192], sizes = [8, 64], strides = [1, 1]} : vector<8x256xf32> to vector<8x64xf32>
    %50 = math.tanh %49 : vector<8x64xf32>
    %51 = arith.mulf %47, %30 : vector<8x64xf32>
    %52 = arith.mulf %46, %50 : vector<8x64xf32>
    %53 = arith.addf %51, %52 : vector<8x64xf32>
    %54 = math.tanh %53 : vector<8x64xf32>
    %55 = arith.mulf %48, %54 : vector<8x64xf32>
    %c2_i32 = arith.constant 2 : i32
    %c8_i32_20 = arith.constant 8 : i32
    %56 = arith.muli %c2_i32, %c8_i32_20 : i32
    %57 = tpu.assume_multiple %56, 8 : i32
    %58 = arith.index_cast %57 : i32 to index
    %c0_21 = arith.constant 0 : index
    %59 = vector.load %arg9[%58, %c0_21] : memref<64x256xf32, #tpu.memory_space<vmem>>, vector<8x256xf32>
    %60 = arith.truncf %55 : vector<8x64xf32> to vector<8x64xbf16>
    %cst_22 = arith.constant dense<0.000000e+00> : vector<8x256xf32>
    %61 = tpu.matmul %60, %7, %cst_22 {dimension_numbers = #tpu.dot_dimension_numbers<[1], [0], [0], [1], [0, 0, 1, 1], [], []>} : vector<8x64xbf16>, vector<64x256xbf16>, vector<8x256xf32> -> vector<8x256xf32>
    %62 = arith.addf %59, %61 : vector<8x256xf32>
    %63 = vector.extract_strided_slice %62 {offsets = [0, 0], sizes = [8, 192], strides = [1, 1]} : vector<8x256xf32> to vector<8x192xf32>
    %64 = arith.negf %63 : vector<8x192xf32>
    %65 = math.exp %64 : vector<8x192xf32>
    %cst_23 = arith.constant 1.000000e+00 : f32
    %66 = vector.broadcast %cst_23 : f32 to vector<8x192xf32>
    %67 = arith.addf %66, %65 : vector<8x192xf32>
    %68 = arith.divf %66, %67 : vector<8x192xf32>
    %69 = vector.extract_strided_slice %68 {offsets = [0, 0], sizes = [8, 64], strides = [1, 1]} : vector<8x192xf32> to vector<8x64xf32>
    %70 = vector.extract_strided_slice %68 {offsets = [0, 64], sizes = [8, 64], strides = [1, 1]} : vector<8x192xf32> to vector<8x64xf32>
    %71 = vector.extract_strided_slice %68 {offsets = [0, 128], sizes = [8, 64], strides = [1, 1]} : vector<8x192xf32> to vector<8x64xf32>
    %72 = vector.extract_strided_slice %62 {offsets = [0, 192], sizes = [8, 64], strides = [1, 1]} : vector<8x256xf32> to vector<8x64xf32>
    %73 = math.tanh %72 : vector<8x64xf32>
    %74 = arith.mulf %70, %53 : vector<8x64xf32>
    %75 = arith.mulf %69, %73 : vector<8x64xf32>
    %76 = arith.addf %74, %75 : vector<8x64xf32>
    %77 = math.tanh %76 : vector<8x64xf32>
    %78 = arith.mulf %71, %77 : vector<8x64xf32>
    %c3_i32 = arith.constant 3 : i32
    %c8_i32_24 = arith.constant 8 : i32
    %79 = arith.muli %c3_i32, %c8_i32_24 : i32
    %80 = tpu.assume_multiple %79, 8 : i32
    %81 = arith.index_cast %80 : i32 to index
    %c0_25 = arith.constant 0 : index
    %82 = vector.load %arg9[%81, %c0_25] : memref<64x256xf32, #tpu.memory_space<vmem>>, vector<8x256xf32>
    %83 = arith.truncf %78 : vector<8x64xf32> to vector<8x64xbf16>
    %cst_26 = arith.constant dense<0.000000e+00> : vector<8x256xf32>
    %84 = tpu.matmul %83, %7, %cst_26 {dimension_numbers = #tpu.dot_dimension_numbers<[1], [0], [0], [1], [0, 0, 1, 1], [], []>} : vector<8x64xbf16>, vector<64x256xbf16>, vector<8x256xf32> -> vector<8x256xf32>
    %85 = arith.addf %82, %84 : vector<8x256xf32>
    %86 = vector.extract_strided_slice %85 {offsets = [0, 0], sizes = [8, 192], strides = [1, 1]} : vector<8x256xf32> to vector<8x192xf32>
    %87 = arith.negf %86 : vector<8x192xf32>
    %88 = math.exp %87 : vector<8x192xf32>
    %cst_27 = arith.constant 1.000000e+00 : f32
    %89 = vector.broadcast %cst_27 : f32 to vector<8x192xf32>
    %90 = arith.addf %89, %88 : vector<8x192xf32>
    %91 = arith.divf %89, %90 : vector<8x192xf32>
    %92 = vector.extract_strided_slice %91 {offsets = [0, 0], sizes = [8, 64], strides = [1, 1]} : vector<8x192xf32> to vector<8x64xf32>
    %93 = vector.extract_strided_slice %91 {offsets = [0, 64], sizes = [8, 64], strides = [1, 1]} : vector<8x192xf32> to vector<8x64xf32>
    %94 = vector.extract_strided_slice %91 {offsets = [0, 128], sizes = [8, 64], strides = [1, 1]} : vector<8x192xf32> to vector<8x64xf32>
    %95 = vector.extract_strided_slice %85 {offsets = [0, 192], sizes = [8, 64], strides = [1, 1]} : vector<8x256xf32> to vector<8x64xf32>
    %96 = math.tanh %95 : vector<8x64xf32>
    %97 = arith.mulf %93, %76 : vector<8x64xf32>
    %98 = arith.mulf %92, %96 : vector<8x64xf32>
    %99 = arith.addf %97, %98 : vector<8x64xf32>
    %100 = math.tanh %99 : vector<8x64xf32>
    %101 = arith.mulf %94, %100 : vector<8x64xf32>
    %c4_i32 = arith.constant 4 : i32
    %c8_i32_28 = arith.constant 8 : i32
    %102 = arith.muli %c4_i32, %c8_i32_28 : i32
    %103 = tpu.assume_multiple %102, 8 : i32
    %104 = arith.index_cast %103 : i32 to index
    %c0_29 = arith.constant 0 : index
    %105 = vector.load %arg9[%104, %c0_29] : memref<64x256xf32, #tpu.memory_space<vmem>>, vector<8x256xf32>
    %106 = arith.truncf %101 : vector<8x64xf32> to vector<8x64xbf16>
    %cst_30 = arith.constant dense<0.000000e+00> : vector<8x256xf32>
    %107 = tpu.matmul %106, %7, %cst_30 {dimension_numbers = #tpu.dot_dimension_numbers<[1], [0], [0], [1], [0, 0, 1, 1], [], []>} : vector<8x64xbf16>, vector<64x256xbf16>, vector<8x256xf32> -> vector<8x256xf32>
    %108 = arith.addf %105, %107 : vector<8x256xf32>
    %109 = vector.extract_strided_slice %108 {offsets = [0, 0], sizes = [8, 192], strides = [1, 1]} : vector<8x256xf32> to vector<8x192xf32>
    %110 = arith.negf %109 : vector<8x192xf32>
    %111 = math.exp %110 : vector<8x192xf32>
    %cst_31 = arith.constant 1.000000e+00 : f32
    %112 = vector.broadcast %cst_31 : f32 to vector<8x192xf32>
    %113 = arith.addf %112, %111 : vector<8x192xf32>
    %114 = arith.divf %112, %113 : vector<8x192xf32>
    %115 = vector.extract_strided_slice %114 {offsets = [0, 0], sizes = [8, 64], strides = [1, 1]} : vector<8x192xf32> to vector<8x64xf32>
    %116 = vector.extract_strided_slice %114 {offsets = [0, 64], sizes = [8, 64], strides = [1, 1]} : vector<8x192xf32> to vector<8x64xf32>
    %117 = vector.extract_strided_slice %114 {offsets = [0, 128], sizes = [8, 64], strides = [1, 1]} : vector<8x192xf32> to vector<8x64xf32>
    %118 = vector.extract_strided_slice %108 {offsets = [0, 192], sizes = [8, 64], strides = [1, 1]} : vector<8x256xf32> to vector<8x64xf32>
    %119 = math.tanh %118 : vector<8x64xf32>
    %120 = arith.mulf %116, %99 : vector<8x64xf32>
    %121 = arith.mulf %115, %119 : vector<8x64xf32>
    %122 = arith.addf %120, %121 : vector<8x64xf32>
    %123 = math.tanh %122 : vector<8x64xf32>
    %124 = arith.mulf %117, %123 : vector<8x64xf32>
    %c5_i32 = arith.constant 5 : i32
    %c8_i32_32 = arith.constant 8 : i32
    %125 = arith.muli %c5_i32, %c8_i32_32 : i32
    %126 = tpu.assume_multiple %125, 8 : i32
    %127 = arith.index_cast %126 : i32 to index
    %c0_33 = arith.constant 0 : index
    %128 = vector.load %arg9[%127, %c0_33] : memref<64x256xf32, #tpu.memory_space<vmem>>, vector<8x256xf32>
    %129 = arith.truncf %124 : vector<8x64xf32> to vector<8x64xbf16>
    %cst_34 = arith.constant dense<0.000000e+00> : vector<8x256xf32>
    %130 = tpu.matmul %129, %7, %cst_34 {dimension_numbers = #tpu.dot_dimension_numbers<[1], [0], [0], [1], [0, 0, 1, 1], [], []>} : vector<8x64xbf16>, vector<64x256xbf16>, vector<8x256xf32> -> vector<8x256xf32>
    %131 = arith.addf %128, %130 : vector<8x256xf32>
    %132 = vector.extract_strided_slice %131 {offsets = [0, 0], sizes = [8, 192], strides = [1, 1]} : vector<8x256xf32> to vector<8x192xf32>
    %133 = arith.negf %132 : vector<8x192xf32>
    %134 = math.exp %133 : vector<8x192xf32>
    %cst_35 = arith.constant 1.000000e+00 : f32
    %135 = vector.broadcast %cst_35 : f32 to vector<8x192xf32>
    %136 = arith.addf %135, %134 : vector<8x192xf32>
    %137 = arith.divf %135, %136 : vector<8x192xf32>
    %138 = vector.extract_strided_slice %137 {offsets = [0, 0], sizes = [8, 64], strides = [1, 1]} : vector<8x192xf32> to vector<8x64xf32>
    %139 = vector.extract_strided_slice %137 {offsets = [0, 64], sizes = [8, 64], strides = [1, 1]} : vector<8x192xf32> to vector<8x64xf32>
    %140 = vector.extract_strided_slice %137 {offsets = [0, 128], sizes = [8, 64], strides = [1, 1]} : vector<8x192xf32> to vector<8x64xf32>
    %141 = vector.extract_strided_slice %131 {offsets = [0, 192], sizes = [8, 64], strides = [1, 1]} : vector<8x256xf32> to vector<8x64xf32>
    %142 = math.tanh %141 : vector<8x64xf32>
    %143 = arith.mulf %139, %122 : vector<8x64xf32>
    %144 = arith.mulf %138, %142 : vector<8x64xf32>
    %145 = arith.addf %143, %144 : vector<8x64xf32>
    %146 = math.tanh %145 : vector<8x64xf32>
    %147 = arith.mulf %140, %146 : vector<8x64xf32>
    %c6_i32 = arith.constant 6 : i32
    %c8_i32_36 = arith.constant 8 : i32
    %148 = arith.muli %c6_i32, %c8_i32_36 : i32
    %149 = tpu.assume_multiple %148, 8 : i32
    %150 = arith.index_cast %149 : i32 to index
    %c0_37 = arith.constant 0 : index
    %151 = vector.load %arg9[%150, %c0_37] : memref<64x256xf32, #tpu.memory_space<vmem>>, vector<8x256xf32>
    %152 = arith.truncf %147 : vector<8x64xf32> to vector<8x64xbf16>
    %cst_38 = arith.constant dense<0.000000e+00> : vector<8x256xf32>
    %153 = tpu.matmul %152, %7, %cst_38 {dimension_numbers = #tpu.dot_dimension_numbers<[1], [0], [0], [1], [0, 0, 1, 1], [], []>} : vector<8x64xbf16>, vector<64x256xbf16>, vector<8x256xf32> -> vector<8x256xf32>
    %154 = arith.addf %151, %153 : vector<8x256xf32>
    %155 = vector.extract_strided_slice %154 {offsets = [0, 0], sizes = [8, 192], strides = [1, 1]} : vector<8x256xf32> to vector<8x192xf32>
    %156 = arith.negf %155 : vector<8x192xf32>
    %157 = math.exp %156 : vector<8x192xf32>
    %cst_39 = arith.constant 1.000000e+00 : f32
    %158 = vector.broadcast %cst_39 : f32 to vector<8x192xf32>
    %159 = arith.addf %158, %157 : vector<8x192xf32>
    %160 = arith.divf %158, %159 : vector<8x192xf32>
    %161 = vector.extract_strided_slice %160 {offsets = [0, 0], sizes = [8, 64], strides = [1, 1]} : vector<8x192xf32> to vector<8x64xf32>
    %162 = vector.extract_strided_slice %160 {offsets = [0, 64], sizes = [8, 64], strides = [1, 1]} : vector<8x192xf32> to vector<8x64xf32>
    %163 = vector.extract_strided_slice %160 {offsets = [0, 128], sizes = [8, 64], strides = [1, 1]} : vector<8x192xf32> to vector<8x64xf32>
    %164 = vector.extract_strided_slice %154 {offsets = [0, 192], sizes = [8, 64], strides = [1, 1]} : vector<8x256xf32> to vector<8x64xf32>
    %165 = math.tanh %164 : vector<8x64xf32>
    %166 = arith.mulf %162, %145 : vector<8x64xf32>
    %167 = arith.mulf %161, %165 : vector<8x64xf32>
    %168 = arith.addf %166, %167 : vector<8x64xf32>
    %169 = math.tanh %168 : vector<8x64xf32>
    %170 = arith.mulf %163, %169 : vector<8x64xf32>
    %c7_i32 = arith.constant 7 : i32
    %c8_i32_40 = arith.constant 8 : i32
    %171 = arith.muli %c7_i32, %c8_i32_40 : i32
    %172 = tpu.assume_multiple %171, 8 : i32
    %173 = arith.index_cast %172 : i32 to index
    %c0_41 = arith.constant 0 : index
    %174 = vector.load %arg9[%173, %c0_41] : memref<64x256xf32, #tpu.memory_space<vmem>>, vector<8x256xf32>
    %175 = arith.truncf %170 : vector<8x64xf32> to vector<8x64xbf16>
    %cst_42 = arith.constant dense<0.000000e+00> : vector<8x256xf32>
    %176 = tpu.matmul %175, %7, %cst_42 {dimension_numbers = #tpu.dot_dimension_numbers<[1], [0], [0], [1], [0, 0, 1, 1], [], []>} : vector<8x64xbf16>, vector<64x256xbf16>, vector<8x256xf32> -> vector<8x256xf32>
    %177 = arith.addf %174, %176 : vector<8x256xf32>
    %178 = vector.extract_strided_slice %177 {offsets = [0, 0], sizes = [8, 192], strides = [1, 1]} : vector<8x256xf32> to vector<8x192xf32>
    %179 = arith.negf %178 : vector<8x192xf32>
    %180 = math.exp %179 : vector<8x192xf32>
    %cst_43 = arith.constant 1.000000e+00 : f32
    %181 = vector.broadcast %cst_43 : f32 to vector<8x192xf32>
    %182 = arith.addf %181, %180 : vector<8x192xf32>
    %183 = arith.divf %181, %182 : vector<8x192xf32>
    %184 = vector.extract_strided_slice %183 {offsets = [0, 0], sizes = [8, 64], strides = [1, 1]} : vector<8x192xf32> to vector<8x64xf32>
    %185 = vector.extract_strided_slice %183 {offsets = [0, 64], sizes = [8, 64], strides = [1, 1]} : vector<8x192xf32> to vector<8x64xf32>
    %186 = vector.extract_strided_slice %183 {offsets = [0, 128], sizes = [8, 64], strides = [1, 1]} : vector<8x192xf32> to vector<8x64xf32>
    %187 = vector.extract_strided_slice %177 {offsets = [0, 192], sizes = [8, 64], strides = [1, 1]} : vector<8x256xf32> to vector<8x64xf32>
    %188 = math.tanh %187 : vector<8x64xf32>
    %189 = arith.mulf %185, %168 : vector<8x64xf32>
    %190 = arith.mulf %184, %188 : vector<8x64xf32>
    %191 = arith.addf %189, %190 : vector<8x64xf32>
    %192 = math.tanh %191 : vector<8x64xf32>
    %193 = arith.mulf %186, %192 : vector<8x64xf32>
    %c8_i32_44 = arith.constant 8 : i32
    %c0_45 = arith.constant 0 : index
    %c0_46 = arith.constant 0 : index
    %194 = vector.load %arg6[%c0_45, %c0_46] : memref<16x8xf32, #tpu.memory_space<vmem>>, vector<16x8xf32>
    %cst_47 = arith.constant dense<0.000000e+00> : vector<16x64xf32>
    %195 = tpu.matmul %194, %193, %cst_47 {dimension_numbers = #tpu.dot_dimension_numbers<[1], [0], [0], [1], [0, 0, 1, 1], [], []>} : vector<16x8xf32>, vector<8x64xf32>, vector<16x64xf32> -> vector<16x64xf32>
    %196 = tpu.iota {dimensions = array<i32: 0>} : vector<8x1xi32>
    %c4_i32_48 = arith.constant 4 : i32
    %197 = vector.broadcast %c4_i32_48 : i32 to vector<8x1xi32>
    %198 = arith.cmpi slt, %196, %197 : vector<8x1xi32>
    %199 = vector.extract_strided_slice %195 {offsets = [0, 0], sizes = [8, 32], strides = [1, 1]} : vector<16x64xf32> to vector<8x32xf32>
    %200 = vector.extract_strided_slice %195 {offsets = [0, 32], sizes = [8, 32], strides = [1, 1]} : vector<16x64xf32> to vector<8x32xf32>
    %201 = vector.shape_cast %198 : vector<8x1xi1> to vector<8x1xi1>
    %202 = vector.broadcast %201 : vector<8x1xi1> to vector<8x32xi1>
    %203 = arith.select %202, %199, %200 : vector<8x32xi1>, vector<8x32xf32>
    %204 = vector.extract_strided_slice %195 {offsets = [8, 0], sizes = [8, 32], strides = [1, 1]} : vector<16x64xf32> to vector<8x32xf32>
    %205 = vector.extract_strided_slice %195 {offsets = [8, 32], sizes = [8, 32], strides = [1, 1]} : vector<16x64xf32> to vector<8x32xf32>
    %206 = vector.shape_cast %198 : vector<8x1xi1> to vector<8x1xi1>
    %207 = vector.broadcast %206 : vector<8x1xi1> to vector<8x32xi1>
    %208 = arith.select %207, %204, %205 : vector<8x32xi1>, vector<8x32xf32>
    %209 = tpu.concatenate %203, %208 in 1 : vector<8x32xf32>, vector<8x32xf32> -> vector<8x64xf32>
    %c0_49 = arith.constant 0 : index
    %c0_50 = arith.constant 0 : index
    %210 = vector.load %arg7[%c0_49, %c0_50] : memref<64x3xf32, #tpu.memory_space<vmem>>, vector<64x3xf32>
    %cst_51 = arith.constant dense<0.000000e+00> : vector<8x3xf32>
    %211 = tpu.matmul %209, %210, %cst_51 {dimension_numbers = #tpu.dot_dimension_numbers<[1], [0], [0], [1], [0, 0, 1, 1], [], []>} : vector<8x64xf32>, vector<64x3xf32>, vector<8x3xf32> -> vector<8x3xf32>
    %212 = math.tanh %211 : vector<8x3xf32>
    %c0_52 = arith.constant 0 : index
    %c0_53 = arith.constant 0 : index
    %213 = vector.load %arg8[%c0_52, %c0_53] : memref<8x3xf32, #tpu.memory_space<vmem>>, vector<8x3xf32>
    tpu.vector_store %arg8[%c0_52, %c0_53], %212 {strides = array<i32>} : memref<8x3xf32, #tpu.memory_space<vmem>>, vector<8x3xf32>,
    return
  }
}

</mosaic_0001>

<llo_original>
// kernel: tpu_custom_call.1
$region0: #{tpu_custom_call.1}
  #allocation0 [shape = 'u32[]', space=smem, size = 0x4, offset = 0x4, fixed_abs, tag = 'smem constant byte address 0x4 - core index']
  #allocation1 [shape = 'u32[144,128]{1,0:T(1,128)}', space=vmem, size = 0x12000, scoped, tag = 'internal scratch']
  #allocation2 [shape = 'f32[64,256]{1,0:T(8,128)}', space=vmem, size = 0x10000, scoped, tag = 'scratch operand']
  %s0 = inlined_call_operand.vmem [shape: bf16[64,32], index: 0, kind: input, shape index: {}]
  %s1 = inlined_call_operand.vmem [shape: f32[8,64], index: 1, kind: input, shape index: {}]
  %s2 = inlined_call_operand.vmem [shape: f32[8,64], index: 2, kind: input, shape index: {}]
  %s3 = inlined_call_operand.vmem [shape: bf16[32,256], index: 3, kind: input, shape index: {}]
  %s4 = inlined_call_operand.vmem [shape: bf16[64,256], index: 4, kind: input, shape index: {}]
  %s5 = inlined_call_operand.vmem [shape: f32[1,256], index: 5, kind: input, shape index: {}]
  %s6 = inlined_call_operand.vmem [shape: f32[16,8], index: 6, kind: input, shape index: {}]
  %s7 = inlined_call_operand.vmem [shape: f32[64,3], index: 7, kind: input, shape index: {}]
  %s8 = inlined_call_operand.vmem [shape: f32[8,3], index: 8, kind: output, shape index: {}]
  %s9 = sld [smem:[#allocation0]]
  $region42: #{tpu_custom_call.1} parent=0
    _
  %s11 = ssub.s32 1, %s9
  %s12 = scalar_select 0, %s11, %s9
  // Predicated region
  $region2: #{tpu_custom_call.1} parent=0 // pred_check
    _
  $region3: #{tpu_custom_call.1} parent=0 // pred_check_branch
    %14 = sbr.rel (0) target = $region5
  $region4: #{tpu_custom_call.1} parent=0 // pred_region
    _
  $region5: #{tpu_custom_call.1} parent=0 // pred_fallthru
    _
  // Predicated region
  $region6: #{tpu_custom_call.1} parent=0 // pred_check
    _
  $region7: #{tpu_custom_call.1} parent=0 // pred_check_branch
    %16 = sbr.rel (0) target = $region9
  $region8: #{tpu_custom_call.1} parent=0 // pred_region
    _
  $region9: #{tpu_custom_call.1} parent=0 // pred_fallthru
    _
  // Predicated region
  $region10: #{tpu_custom_call.1} parent=0 // pred_check
    _
  $region11: #{tpu_custom_call.1} parent=0 // pred_check_branch
    %18 = sbr.rel (0) target = $region13
  $region12: #{tpu_custom_call.1} parent=0 // pred_region
    _
  $region13: #{tpu_custom_call.1} parent=0 // pred_fallthru
    _
  // Predicated region
  $region14: #{tpu_custom_call.1} parent=0 // pred_check
    _
  $region15: #{tpu_custom_call.1} parent=0 // pred_check_branch
    %20 = sbr.rel (0) target = $region17
  $region16: #{tpu_custom_call.1} parent=0 // pred_region
    _
  $region17: #{tpu_custom_call.1} parent=0 // pred_fallthru
    _
  // Predicated region
  $region18: #{tpu_custom_call.1} parent=0 // pred_check
    _
  $region19: #{tpu_custom_call.1} parent=0 // pred_check_branch
    %22 = sbr.rel (0) target = $region21
  $region20: #{tpu_custom_call.1} parent=0 // pred_region
    _
  $region21: #{tpu_custom_call.1} parent=0 // pred_fallthru
    _
  // Predicated region
  $region22: #{tpu_custom_call.1} parent=0 // pred_check
    _
  $region23: #{tpu_custom_call.1} parent=0 // pred_check_branch
    %24 = sbr.rel (0) target = $region25
  $region24: #{tpu_custom_call.1} parent=0 // pred_region
    _
  $region25: #{tpu_custom_call.1} parent=0 // pred_fallthru
    _
  // Predicated region
  $region26: #{tpu_custom_call.1} parent=0 // pred_check
    _
  $region27: #{tpu_custom_call.1} parent=0 // pred_check_branch
    %26 = sbr.rel (0) target = $region29
  $region28: #{tpu_custom_call.1} parent=0 // pred_region
    _
  $region29: #{tpu_custom_call.1} parent=0 // pred_fallthru
    _
  // Predicated region
  $region30: #{tpu_custom_call.1} parent=0 // pred_check
    _
  $region31: #{tpu_custom_call.1} parent=0 // pred_check_branch
    %28 = sbr.rel (0) target = $region33
  $region32: #{tpu_custom_call.1} parent=0 // pred_region
    _
  $region33: #{tpu_custom_call.1} parent=0 // pred_fallthru
    _
  %v30 = vld [vmem:[%s0] sm:$0xf]
  %v31 = vld [vmem:[%s0 + $0x4] sm:$0xf]
  %v32 = vld [vmem:[%s0 + $0x8] sm:$0xf]
  %v33 = vld [vmem:[%s0 + $0xc] sm:$0xf]
  %v34 = vld [vmem:[%s0 + $0x10] sm:$0xf]
  %v35 = vld [vmem:[%s0 + $0x14] sm:$0xf]
  %v36 = vld [vmem:[%s0 + $0x18] sm:$0xf]
  %v37 = vld [vmem:[%s0 + $0x1c] sm:$0xf]
  %v38 = vld [vmem:[%s3] sm:$0xff]
  %v39 = vld [vmem:[%s3 + $0x8] sm:$0xff]
  %v40 = vld [vmem:[%s3 + $0x10] sm:$0xff]
  %v41 = vld [vmem:[%s3 + $0x18] sm:$0xff]
  %v42 = vld [vmem:[%s5] sm:$0x3]
  %v44 = vlaneseq
  %v45 = vshrl.u32 %v44, 7
  %v46 = vsub.s32 0, %v45
  %v47 = vrot.slane %v42, %v46
  %v48 = vlaneseq
  %v49 = vshrl.u32 %v48, 7
  %v50 = vsub.s32 1, %v49
  %v51 = vrot.slane %v42, %v50
  %v62 = vunpack.c.l.b16 %v30
  %v63 = vunpack.c.l.b16 %v31
  %v64 = vunpack.c.l.b16 %v32
  %v65 = vunpack.c.l.b16 %v33
  %v66 = vunpack.c.l.b16 %v34
  %v67 = vunpack.c.l.b16 %v35
  %v68 = vunpack.c.l.b16 %v36
  %v69 = vunpack.c.l.b16 %v37
  %v70 = vpack.c.b16 %v63, %v62
  %v71 = vpack.c.b16 %v65, %v64
  %v72 = vpack.c.b16 %v67, %v66
  %v73 = vpack.c.b16 %v69, %v68
  %v78 = vunpack.c.l.b16 %v38
  %v79 = vunpack.c.h.b16 %v38
  %v80 = vunpack.c.l.b16 %v39
  %v81 = vunpack.c.h.b16 %v39
  %v82 = vunpack.c.l.b16 %v40
  %v83 = vunpack.c.h.b16 %v40
  %v84 = vunpack.c.l.b16 %v41
  %v85 = vunpack.c.h.b16 %v41
  %v86 = vpack.c.b16 %v80, %v78
  %v87 = vpack.c.b16 %v81, %v79
  %v88 = vpack.c.b16 %v84, %v82
  %v89 = vpack.c.b16 %v85, %v83
  %vm94 = vcmask 261120
  %v96 = vsel %vm94, %v70, 0
  %v99 = vsel %vm94, %v71, 0
  %v102 = vsel %vm94, %v72, 0
  %v105 = vsel %vm94, %v73, 0
  %107 = vmatprep.subr.bf16.mxu0 0
  %108 = vmatpush1.bf16.msra.mxu0 0
  %109 = vmatprep.subr.bf16.mxu0 0
  %110 = vmatpush1.bf16.msra.mxu0 0
  %111 = vmatprep.subr.bf16.mxu0 0
  %112 = vmatpush1.bf16.msra.mxu0 0
  %113 = vmatprep.subr.bf16.mxu0 0
  %114 = vmatpush1.bf16.msra.mxu0 0
  %115 = vmatprep.subr.bf16.mxu0 0
  %116 = vmatpush1.bf16.msra.mxu0 0
  %117 = vmatprep.subr.bf16.mxu0 0
  %118 = vmatpush1.bf16.msra.mxu0 0
  %119 = vmatprep.subr.bf16.mxu0 %v89
  %120 = vmatpush1.bf16.msra.mxu0 %v88
  %121 = vmatprep.subr.bf16.mxu0 %v87
  %122 = vmatpush1.bf16.msra.mxu0 %v86
  %123 = vmatprep.subr.bf16.mxu0 0
  %124 = vmatpush2.bf16.msra.mxu0 0
  %125 = vmatprep.subr.bf16.mxu0 0
  %126 = vmatpush2.bf16.msra.mxu0 0
  %127 = vmatprep.subr.bf16.mxu0 0
  %128 = vmatpush2.bf16.msra.mxu0 0
  %129 = vmatprep.subr.bf16.mxu0 0
  %130 = vmatpush2.bf16.msra.mxu0 0
  %131 = vmatprep.subr.bf16.mxu0 0
  %132 = vmatpush2.bf16.msra.mxu0 0
  %133 = vmatprep.subr.bf16.mxu0 0
  %134 = vmatpush2.bf16.msra.mxu0 0
  %135 = vmatprep.subr.bf16.mxu0 0
  %136 = vmatpush2.bf16.msra.mxu0 0
  %137 = vmatprep.subr.bf16.mxu0 0
  %138 = vmatpush2.bf16.msra.mxu0 0
  %139 = vmatprep.mubr.bf16.mxu0 0
  %140 = vmatmul.mubr.bf16.gmra.mxu0 %v96
  %v141 = vpop.f32.mrf.mxu0
  %v142 = vadd.f32 %v47, %v141
  %v143 = vpop.f32.mrf.mxu0
  %v144 = vadd.f32 %v51, %v143
  %v145 = vpop.f32.mrf.mxu0
  %v146 = vadd.f32 %v47, %v145
  %v147 = vpop.f32.mrf.mxu0
  %v148 = vadd.f32 %v51, %v147
  %149 = vmatprep.mubr.bf16.mxu0 0
  %150 = vmatmul.mubr.bf16.gmra.mxu0 %v99
  %v151 = vpop.f32.mrf.mxu0
  %v152 = vadd.f32 %v47, %v151
  %v153 = vpop.f32.mrf.mxu0
  %v154 = vadd.f32 %v51, %v153
  %v155 = vpop.f32.mrf.mxu0
  %v156 = vadd.f32 %v47, %v155
  %v157 = vpop.f32.mrf.mxu0
  %v158 = vadd.f32 %v51, %v157
  %159 = vmatprep.mubr.bf16.mxu0 0
  %160 = vmatmul.mubr.bf16.gmra.mxu0 %v102
  %v161 = vpop.f32.mrf.mxu0
  %v162 = vadd.f32 %v47, %v161
  %v163 = vpop.f32.mrf.mxu0
  %v164 = vadd.f32 %v51, %v163
  %v165 = vpop.f32.mrf.mxu0
  %v166 = vadd.f32 %v47, %v165
  %v167 = vpop.f32.mrf.mxu0
  %v168 = vadd.f32 %v51, %v167
  %169 = vmatprep.mubr.bf16.mxu0 0
  %170 = vmatmul.mubr.bf16.gmra.mxu0 %v105
  %v171 = vpop.f32.mrf.mxu0
  %v172 = vadd.f32 %v47, %v171
  %v173 = vpop.f32.mrf.mxu0
  %v174 = vadd.f32 %v51, %v173
  %v175 = vpop.f32.mrf.mxu0
  %v176 = vadd.f32 %v47, %v175
  %v177 = vpop.f32.mrf.mxu0
  %v178 = vadd.f32 %v51, %v177
  %179 = vdwg.mxu0
  %180 = vst [vmem:[#allocation2] sm:$0xff] %v142
  %181 = vst [vmem:[#allocation2 + $0x8] sm:$0xff] %v144
  %182 = vst [vmem:[#allocation2 + $0x10] sm:$0xff] %v146
  %183 = vst [vmem:[#allocation2 + $0x18] sm:$0xff] %v148
  %184 = vst [vmem:[#allocation2 + $0x20] sm:$0xff] %v152
  %185 = vst [vmem:[#allocation2 + $0x28] sm:$0xff] %v154
  %186 = vst [vmem:[#allocation2 + $0x30] sm:$0xff] %v156
  %187 = vst [vmem:[#allocation2 + $0x38] sm:$0xff] %v158
  %188 = vst [vmem:[#allocation2 + $0x40] sm:$0xff] %v162
  %189 = vst [vmem:[#allocation2 + $0x48] sm:$0xff] %v164
  %190 = vst [vmem:[#allocation2 + $0x50] sm:$0xff] %v166
  %191 = vst [vmem:[#allocation2 + $0x58] sm:$0xff] %v168
  %192 = vst [vmem:[#allocation2 + $0x60] sm:$0xff] %v172
  %193 = vst [vmem:[#allocation2 + $0x68] sm:$0xff] %v174
  %194 = vst [vmem:[#allocation2 + $0x70] sm:$0xff] %v176
  %195 = vst [vmem:[#allocation2 + $0x78] sm:$0xff] %v178
  %v196 = vld [vmem:[%s4] sm:$0xff]
  %v197 = vld [vmem:[%s4 + $0x8] sm:$0xff]
  %v198 = vld [vmem:[%s4 + $0x10] sm:$0xff]
  %v199 = vld [vmem:[%s4 + $0x18] sm:$0xff]
  %v200 = vld [vmem:[%s4 + $0x20] sm:$0xff]
  %v201 = vld [vmem:[%s4 + $0x28] sm:$0xff]
  %v202 = vld [vmem:[%s4 + $0x30] sm:$0xff]
  %v203 = vld [vmem:[%s4 + $0x38] sm:$0xff]
  %v204 = vld [vmem:[%s1] sm:$0xff]
  %v205 = vld [vmem:[%s2] sm:$0xff]
  %s206 = smul.u32 0, 2
  %s207 = smul.addr %s206, 8
  %s208 = scalar_lea.vmem [#allocation2], %s207
  %v209 = vld [vmem:[%s208] sm:$0xff]
  %v210 = vld [vmem:[%s208 + $0x8] sm:$0xff]
  %v211 = vpack.c.bf16 %v204, %v204
  %v220 = vunpack.c.l.b16 %v196
  %v221 = vunpack.c.h.b16 %v196
  %v222 = vunpack.c.l.b16 %v197
  %v223 = vunpack.c.h.b16 %v197
  %v224 = vunpack.c.l.b16 %v198
  %v225 = vunpack.c.h.b16 %v198
  %v226 = vunpack.c.l.b16 %v199
  %v227 = vunpack.c.h.b16 %v199
  %v228 = vunpack.c.l.b16 %v200
  %v229 = vunpack.c.h.b16 %v200
  %v230 = vunpack.c.l.b16 %v201
  %v231 = vunpack.c.h.b16 %v201
  %v232 = vunpack.c.l.b16 %v202
  %v233 = vunpack.c.h.b16 %v202
  %v234 = vunpack.c.l.b16 %v203
  %v235 = vunpack.c.h.b16 %v203
  %v236 = vpack.c.b16 %v222, %v220
  %v237 = vpack.c.b16 %v223, %v221
  %v238 = vpack.c.b16 %v226, %v224
  %v239 = vpack.c.b16 %v227, %v225
  %v240 = vpack.c.b16 %v230, %v228
  %v241 = vpack.c.b16 %v231, %v229
  %v242 = vpack.c.b16 %v234, %v232
  %v243 = vpack.c.b16 %v235, %v233
  %vm252 = vcmask 523264
  %v254 = vsel %vm252, %v211, 0
  %256 = vmatprep.subr.bf16.mxu0 0
  %257 = vmatpush1.bf16.msra.mxu0 0
  %258 = vmatprep.subr.bf16.mxu0 0
  %259 = vmatpush1.bf16.msra.mxu0 0
  %260 = vmatprep.subr.bf16.mxu0 0
  %261 = vmatpush1.bf16.msra.mxu0 0
  %262 = vmatprep.subr.bf16.mxu0 0
  %263 = vmatpush1.bf16.msra.mxu0 0
  %264 = vmatprep.subr.bf16.mxu0 %v243
  %265 = vmatpush1.bf16.msra.mxu0 %v242
  %266 = vmatprep.subr.bf16.mxu0 %v241
  %267 = vmatpush1.bf16.msra.mxu0 %v240
  %268 = vmatprep.subr.bf16.mxu0 %v239
  %269 = vmatpush1.bf16.msra.mxu0 %v238
  %270 = vmatprep.subr.bf16.mxu0 %v237
  %271 = vmatpush1.bf16.msra.mxu0 %v236
  %272 = vmatprep.subr.bf16.mxu0 0
  %273 = vmatpush2.bf16.msra.mxu0 0
  %274 = vmatprep.subr.bf16.mxu0 0
  %275 = vmatpush2.bf16.msra.mxu0 0
  %276 = vmatprep.subr.bf16.mxu0 0
  %277 = vmatpush2.bf16.msra.mxu0 0
  %278 = vmatprep.subr.bf16.mxu0 0
  %279 = vmatpush2.bf16.msra.mxu0 0
  %280 = vmatprep.subr.bf16.mxu0 0
  %281 = vmatpush2.bf16.msra.mxu0 0
  %282 = vmatprep.subr.bf16.mxu0 0
  %283 = vmatpush2.bf16.msra.mxu0 0
  %284 = vmatprep.subr.bf16.mxu0 0
  %285 = vmatpush2.bf16.msra.mxu0 0
  %286 = vmatprep.subr.bf16.mxu0 0
  %287 = vmatpush2.bf16.msra.mxu0 0
  %288 = vmatprep.mubr.bf16.mxu0 0
  %289 = vmatmul.mubr.bf16.gmra.mxu0 %v254
  %v290 = vpop.f32.mrf.mxu0
  %v291 = vadd.f32 0.0, %v290
  %v292 = vpop.f32.mrf.mxu0
  %v293 = vadd.f32 0.0, %v292
  %v294 = vpop.f32.mrf.mxu0
  %v295 = vpop.f32.mrf.mxu0
  %296 = vdwg.mxu0
  %v297 = vadd.f32 %v209, %v291
  %v298 = vadd.f32 %v210, %v293
  %v299 = vxor.u32 %v297, 2147483648
  %v300 = vxor.u32 %v298, 2147483648
  %v301 = vmul.f32 %v299, 1.442695
  %v302 = vpow.pop %v301
  %v303 = vmul.f32 %v300, 1.442695
  %v304 = vpow.pop %v303
  %v305 = vadd.f32 %v302, 1.0
  %v306 = vadd.f32 %v304, 1.0
  %v307 = vrcp.pop %v305
  %v308 = vmul.f32 1.0, %v307
  %v309 = vrcp.pop %v306
  %v310 = vmul.f32 1.0, %v309
  %v311 = vtanh.pop %v298
  %313 = vrot.lane.b32.xlu0 %v205, 64
  %v314 = vpop.permute.xlu0 %313
  %v316 = vmul.f32 %v308, %v314
  %318 = vrot.lane.b32.xlu0 %v311, 64
  %v319 = vpop.permute.xlu0 %318
  %v321 = vmul.f32 %v308, %v319
  %323 = vrot.lane.b32.xlu0 %v321, 64
  %v324 = vpop.permute.xlu0 %323
  %v326 = vadd.f32 %v316, %v324
  %v327 = vtanh.pop %v326
  %329 = vrot.lane.b32.xlu0 %v327, 64
  %v330 = vpop.permute.xlu0 %329
  %v332 = vmul.f32 %v310, %v330
  %s333 = smul.u32 1, 2
  %s334 = smul.addr %s333, 8
  %s335 = scalar_lea.vmem [#allocation2], %s334
  %v336 = vld [vmem:[%s335] sm:$0xff]
  %v337 = vld [vmem:[%s335 + $0x8] sm:$0xff]
  %v338 = vpack.c.bf16 %v332, %v332
  %v340 = vsel %vm252, %v338, 0
  %342 = vmatprep.subr.bf16.mxu0 0
  %343 = vmatpush1.bf16.msra.mxu0 0
  %344 = vmatprep.subr.bf16.mxu0 0
  %345 = vmatpush1.bf16.msra.mxu0 0
  %346 = vmatprep.subr.bf16.mxu0 0
  %347 = vmatpush1.bf16.msra.mxu0 0
  %348 = vmatprep.subr.bf16.mxu0 0
  %349 = vmatpush1.bf16.msra.mxu0 0
  %350 = vmatprep.subr.bf16.mxu0 %v243
  %351 = vmatpush1.bf16.msra.mxu0 %v242
  %352 = vmatprep.subr.bf16.mxu0 %v241
  %353 = vmatpush1.bf16.msra.mxu0 %v240
  %354 = vmatprep.subr.bf16.mxu0 %v239
  %355 = vmatpush1.bf16.msra.mxu0 %v238
  %356 = vmatprep.subr.bf16.mxu0 %v237
  %357 = vmatpush1.bf16.msra.mxu0 %v236
  %358 = vmatprep.subr.bf16.mxu0 0
  %359 = vmatpush2.bf16.msra.mxu0 0
  %360 = vmatprep.subr.bf16.mxu0 0
  %361 = vmatpush2.bf16.msra.mxu0 0
  %362 = vmatprep.subr.bf16.mxu0 0
  %363 = vmatpush2.bf16.msra.mxu0 0
  %364 = vmatprep.subr.bf16.mxu0 0
  %365 = vmatpush2.bf16.msra.mxu0 0
  %366 = vmatprep.subr.bf16.mxu0 0
  %367 = vmatpush2.bf16.msra.mxu0 0
  %368 = vmatprep.subr.bf16.mxu0 0
  %369 = vmatpush2.bf16.msra.mxu0 0
  %370 = vmatprep.subr.bf16.mxu0 0
  %371 = vmatpush2.bf16.msra.mxu0 0
  %372 = vmatprep.subr.bf16.mxu0 0
  %373 = vmatpush2.bf16.msra.mxu0 0
  %374 = vmatprep.mubr.bf16.mxu0 0
  %375 = vmatmul.mubr.bf16.gmra.mxu0 %v340
  %v376 = vpop.f32.mrf.mxu0
  %v377 = vadd.f32 0.0, %v376
  %v378 = vpop.f32.mrf.mxu0
  %v379 = vadd.f32 0.0, %v378
  %v380 = vpop.f32.mrf.mxu0
  %v381 = vpop.f32.mrf.mxu0
  %382 = vdwg.mxu0
  %v383 = vadd.f32 %v336, %v377
  %v384 = vadd.f32 %v337, %v379
  %v385 = vxor.u32 %v383, 2147483648
  %v386 = vxor.u32 %v384, 2147483648
  %v387 = vmul.f32 %v385, 1.442695
  %v388 = vpow.pop %v387
  %v389 = vmul.f32 %v386, 1.442695
  %v390 = vpow.pop %v389
  %v391 = vadd.f32 %v388, 1.0
  %v392 = vadd.f32 %v390, 1.0
  %v393 = vrcp.pop %v391
  %v394 = vmul.f32 1.0, %v393
  %v395 = vrcp.pop %v392
  %v396 = vmul.f32 1.0, %v395
  %v397 = vtanh.pop %v384
  %v398 = vmul.f32 %v394, %v326
  %400 = vrot.lane.b32.xlu0 %v397, 64
  %v401 = vpop.permute.xlu0 %400
  %v403 = vmul.f32 %v394, %v401
  %405 = vrot.lane.b32.xlu0 %v403, 64
  %v406 = vpop.permute.xlu0 %405
  %v408 = vadd.f32 %v398, %v406
  %v409 = vtanh.pop %v408
  %411 = vrot.lane.b32.xlu0 %v409, 64
  %v412 = vpop.permute.xlu0 %411
  %v414 = vmul.f32 %v396, %v412
  %s415 = smul.u32 2, 2
  %s416 = smul.addr %s415, 8
  %s417 = scalar_lea.vmem [#allocation2], %s416
  %v418 = vld [vmem:[%s417] sm:$0xff]
  %v419 = vld [vmem:[%s417 + $0x8] sm:$0xff]
  %v420 = vpack.c.bf16 %v414, %v414
  %v422 = vsel %vm252, %v420, 0
  %424 = vmatprep.subr.bf16.mxu0 0
  %425 = vmatpush1.bf16.msra.mxu0 0
  %426 = vmatprep.subr.bf16.mxu0 0
  %427 = vmatpush1.bf16.msra.mxu0 0
  %428 = vmatprep.subr.bf16.mxu0 0
  %429 = vmatpush1.bf16.msra.mxu0 0
  %430 = vmatprep.subr.bf16.mxu0 0
  %431 = vmatpush1.bf16.msra.mxu0 0
  %432 = vmatprep.subr.bf16.mxu0 %v243
  %433 = vmatpush1.bf16.msra.mxu0 %v242
  %434 = vmatprep.subr.bf16.mxu0 %v241
  %435 = vmatpush1.bf16.msra.mxu0 %v240
  %436 = vmatprep.subr.bf16.mxu0 %v239
  %437 = vmatpush1.bf16.msra.mxu0 %v238
  %438 = vmatprep.subr.bf16.mxu0 %v237
  %439 = vmatpush1.bf16.msra.mxu0 %v236
  %440 = vmatprep.subr.bf16.mxu0 0
  %441 = vmatpush2.bf16.msra.mxu0 0
  %442 = vmatprep.subr.bf16.mxu0 0
  %443 = vmatpush2.bf16.msra.mxu0 0
  %444 = vmatprep.subr.bf16.mxu0 0
  %445 = vmatpush2.bf16.msra.mxu0 0
  %446 = vmatprep.subr.bf16.mxu0 0
  %447 = vmatpush2.bf16.msra.mxu0 0
  %448 = vmatprep.subr.bf16.mxu0 0
  %449 = vmatpush2.bf16.msra.mxu0 0
  %450 = vmatprep.subr.bf16.mxu0 0
  %451 = vmatpush2.bf16.msra.mxu0 0
  %452 = vmatprep.subr.bf16.mxu0 0
  %453 = vmatpush2.bf16.msra.mxu0 0
  %454 = vmatprep.subr.bf16.mxu0 0
  %455 = vmatpush2.bf16.msra.mxu0 0
  %456 = vmatprep.mubr.bf16.mxu0 0
  %457 = vmatmul.mubr.bf16.gmra.mxu0 %v422
  %v458 = vpop.f32.mrf.mxu0
  %v459 = vadd.f32 0.0, %v458
  %v460 = vpop.f32.mrf.mxu0
  %v461 = vadd.f32 0.0, %v460
  %v462 = vpop.f32.mrf.mxu0
  %v463 = vpop.f32.mrf.mxu0
  %464 = vdwg.mxu0
  %v465 = vadd.f32 %v418, %v459
  %v466 = vadd.f32 %v419, %v461
  %v467 = vxor.u32 %v465, 2147483648
  %v468 = vxor.u32 %v466, 2147483648
  %v469 = vmul.f32 %v467, 1.442695
  %v470 = vpow.pop %v469
  %v471 = vmul.f32 %v468, 1.442695
  %v472 = vpow.pop %v471
  %v473 = vadd.f32 %v470, 1.0
  %v474 = vadd.f32 %v472, 1.0
  %v475 = vrcp.pop %v473
  %v476 = vmul.f32 1.0, %v475
  %v477 = vrcp.pop %v474
  %v478 = vmul.f32 1.0, %v477
  %v479 = vtanh.pop %v466
  %v480 = vmul.f32 %v476, %v408
  %482 = vrot.lane.b32.xlu0 %v479, 64
  %v483 = vpop.permute.xlu0 %482
  %v485 = vmul.f32 %v476, %v483
  %487 = vrot.lane.b32.xlu0 %v485, 64
  %v488 = vpop.permute.xlu0 %487
  %v490 = vadd.f32 %v480, %v488
  %v491 = vtanh.pop %v490
  %493 = vrot.lane.b32.xlu0 %v491, 64
  %v494 = vpop.permute.xlu0 %493
  %v496 = vmul.f32 %v478, %v494
  %s497 = smul.u32 3, 2
  %s498 = smul.addr %s497, 8
  %s499 = scalar_lea.vmem [#allocation2], %s498
  %v500 = vld [vmem:[%s499] sm:$0xff]
  %v501 = vld [vmem:[%s499 + $0x8] sm:$0xff]
  %v502 = vpack.c.bf16 %v496, %v496
  %v504 = vsel %vm252, %v502, 0
  %506 = vmatprep.subr.bf16.mxu0 0
  %507 = vmatpush1.bf16.msra.mxu0 0
  %508 = vmatprep.subr.bf16.mxu0 0
  %509 = vmatpush1.bf16.msra.mxu0 0
  %510 = vmatprep.subr.bf16.mxu0 0
  %511 = vmatpush1.bf16.msra.mxu0 0
  %512 = vmatprep.subr.bf16.mxu0 0
  %513 = vmatpush1.bf16.msra.mxu0 0
  %514 = vmatprep.subr.bf16.mxu0 %v243
  %515 = vmatpush1.bf16.msra.mxu0 %v242
  %516 = vmatprep.subr.bf16.mxu0 %v241
  %517 = vmatpush1.bf16.msra.mxu0 %v240
  %518 = vmatprep.subr.bf16.mxu0 %v239
  %519 = vmatpush1.bf16.msra.mxu0 %v238
  %520 = vmatprep.subr.bf16.mxu0 %v237
  %521 = vmatpush1.bf16.msra.mxu0 %v236
  %522 = vmatprep.subr.bf16.mxu0 0
  %523 = vmatpush2.bf16.msra.mxu0 0
  %524 = vmatprep.subr.bf16.mxu0 0
  %525 = vmatpush2.bf16.msra.mxu0 0
  %526 = vmatprep.subr.bf16.mxu0 0
  %527 = vmatpush2.bf16.msra.mxu0 0
  %528 = vmatprep.subr.bf16.mxu0 0
  %529 = vmatpush2.bf16.msra.mxu0 0
  %530 = vmatprep.subr.bf16.mxu0 0
  %531 = vmatpush2.bf16.msra.mxu0 0
  %532 = vmatprep.subr.bf16.mxu0 0
  %533 = vmatpush2.bf16.msra.mxu0 0
  %534 = vmatprep.subr.bf16.mxu0 0
  %535 = vmatpush2.bf16.msra.mxu0 0
  %536 = vmatprep.subr.bf16.mxu0 0
  %537 = vmatpush2.bf16.msra.mxu0 0
  %538 = vmatprep.mubr.bf16.mxu0 0
  %539 = vmatmul.mubr.bf16.gmra.mxu0 %v504
  %v540 = vpop.f32.mrf.mxu0
  %v541 = vadd.f32 0.0, %v540
  %v542 = vpop.f32.mrf.mxu0
  %v543 = vadd.f32 0.0, %v542
  %v544 = vpop.f32.mrf.mxu0
  %v545 = vpop.f32.mrf.mxu0
  %546 = vdwg.mxu0
  %v547 = vadd.f32 %v500, %v541
  %v548 = vadd.f32 %v501, %v543
  %v549 = vxor.u32 %v547, 2147483648
  %v550 = vxor.u32 %v548, 2147483648
  %v551 = vmul.f32 %v549, 1.442695
  %v552 = vpow.pop %v551
  %v553 = vmul.f32 %v550, 1.442695
  %v554 = vpow.pop %v553
  %v555 = vadd.f32 %v552, 1.0
  %v556 = vadd.f32 %v554, 1.0
  %v557 = vrcp.pop %v555
  %v558 = vmul.f32 1.0, %v557
  %v559 = vrcp.pop %v556
  %v560 = vmul.f32 1.0, %v559
  %v561 = vtanh.pop %v548
  %v562 = vmul.f32 %v558, %v490
  %564 = vrot.lane.b32.xlu0 %v561, 64
  %v565 = vpop.permute.xlu0 %564
  %v567 = vmul.f32 %v558, %v565
  %569 = vrot.lane.b32.xlu0 %v567, 64
  %v570 = vpop.permute.xlu0 %569
  %v572 = vadd.f32 %v562, %v570
  %v573 = vtanh.pop %v572
  %575 = vrot.lane.b32.xlu0 %v573, 64
  %v576 = vpop.permute.xlu0 %575
  %v578 = vmul.f32 %v560, %v576
  %s579 = smul.u32 4, 2
  %s580 = smul.addr %s579, 8
  %s581 = scalar_lea.vmem [#allocation2], %s580
  %v582 = vld [vmem:[%s581] sm:$0xff]
  %v583 = vld [vmem:[%s581 + $0x8] sm:$0xff]
  %v584 = vpack.c.bf16 %v578, %v578
  %v586 = vsel %vm252, %v584, 0
  %588 = vmatprep.subr.bf16.mxu0 0
  %589 = vmatpush1.bf16.msra.mxu0 0
  %590 = vmatprep.subr.bf16.mxu0 0
  %591 = vmatpush1.bf16.msra.mxu0 0
  %592 = vmatprep.subr.bf16.mxu0 0
  %593 = vmatpush1.bf16.msra.mxu0 0
  %594 = vmatprep.subr.bf16.mxu0 0
  %595 = vmatpush1.bf16.msra.mxu0 0
  %596 = vmatprep.subr.bf16.mxu0 %v243
  %597 = vmatpush1.bf16.msra.mxu0 %v242
  %598 = vmatprep.subr.bf16.mxu0 %v241
  %599 = vmatpush1.bf16.msra.mxu0 %v240
  %600 = vmatprep.subr.bf16.mxu0 %v239
  %601 = vmatpush1.bf16.msra.mxu0 %v238
  %602 = vmatprep.subr.bf16.mxu0 %v237
  %603 = vmatpush1.bf16.msra.mxu0 %v236
  %604 = vmatprep.subr.bf16.mxu0 0
  %605 = vmatpush2.bf16.msra.mxu0 0
  %606 = vmatprep.subr.bf16.mxu0 0
  %607 = vmatpush2.bf16.msra.mxu0 0
  %608 = vmatprep.subr.bf16.mxu0 0
  %609 = vmatpush2.bf16.msra.mxu0 0
  %610 = vmatprep.subr.bf16.mxu0 0
  %611 = vmatpush2.bf16.msra.mxu0 0
  %612 = vmatprep.subr.bf16.mxu0 0
  %613 = vmatpush2.bf16.msra.mxu0 0
  %614 = vmatprep.subr.bf16.mxu0 0
  %615 = vmatpush2.bf16.msra.mxu0 0
  %616 = vmatprep.subr.bf16.mxu0 0
  %617 = vmatpush2.bf16.msra.mxu0 0
  %618 = vmatprep.subr.bf16.mxu0 0
  %619 = vmatpush2.bf16.msra.mxu0 0
  %620 = vmatprep.mubr.bf16.mxu0 0
  %621 = vmatmul.mubr.bf16.gmra.mxu0 %v586
  %v622 = vpop.f32.mrf.mxu0
  %v623 = vadd.f32 0.0, %v622
  %v624 = vpop.f32.mrf.mxu0
  %v625 = vadd.f32 0.0, %v624
  %v626 = vpop.f32.mrf.mxu0
  %v627 = vpop.f32.mrf.mxu0
  %628 = vdwg.mxu0
  %v629 = vadd.f32 %v582, %v623
  %v630 = vadd.f32 %v583, %v625
  %v631 = vxor.u32 %v629, 2147483648
  %v632 = vxor.u32 %v630, 2147483648
  %v633 = vmul.f32 %v631, 1.442695
  %v634 = vpow.pop %v633
  %v635 = vmul.f32 %v632, 1.442695
  %v636 = vpow.pop %v635
  %v637 = vadd.f32 %v634, 1.0
  %v638 = vadd.f32 %v636, 1.0
  %v639 = vrcp.pop %v637
  %v640 = vmul.f32 1.0, %v639
  %v641 = vrcp.pop %v638
  %v642 = vmul.f32 1.0, %v641
  %v643 = vtanh.pop %v630
  %v644 = vmul.f32 %v640, %v572
  %646 = vrot.lane.b32.xlu0 %v643, 64
  %v647 = vpop.permute.xlu0 %646
  %v649 = vmul.f32 %v640, %v647
  %651 = vrot.lane.b32.xlu0 %v649, 64
  %v652 = vpop.permute.xlu0 %651
  %v654 = vadd.f32 %v644, %v652
  %v655 = vtanh.pop %v654
  %657 = vrot.lane.b32.xlu0 %v655, 64
  %v658 = vpop.permute.xlu0 %657
  %v660 = vmul.f32 %v642, %v658
  %s661 = smul.u32 5, 2
  %s662 = smul.addr %s661, 8
  %s663 = scalar_lea.vmem [#allocation2], %s662
  %v664 = vld [vmem:[%s663] sm:$0xff]
  %v665 = vld [vmem:[%s663 + $0x8] sm:$0xff]
  %v666 = vpack.c.bf16 %v660, %v660
  %v668 = vsel %vm252, %v666, 0
  %670 = vmatprep.subr.bf16.mxu0 0
  %671 = vmatpush1.bf16.msra.mxu0 0
  %672 = vmatprep.subr.bf16.mxu0 0
  %673 = vmatpush1.bf16.msra.mxu0 0
  %674 = vmatprep.subr.bf16.mxu0 0
  %675 = vmatpush1.bf16.msra.mxu0 0
  %676 = vmatprep.subr.bf16.mxu0 0
  %677 = vmatpush1.bf16.msra.mxu0 0
  %678 = vmatprep.subr.bf16.mxu0 %v243
  %679 = vmatpush1.bf16.msra.mxu0 %v242
  %680 = vmatprep.subr.bf16.mxu0 %v241
  %681 = vmatpush1.bf16.msra.mxu0 %v240
  %682 = vmatprep.subr.bf16.mxu0 %v239
  %683 = vmatpush1.bf16.msra.mxu0 %v238
  %684 = vmatprep.subr.bf16.mxu0 %v237
  %685 = vmatpush1.bf16.msra.mxu0 %v236
  %686 = vmatprep.subr.bf16.mxu0 0
  %687 = vmatpush2.bf16.msra.mxu0 0
  %688 = vmatprep.subr.bf16.mxu0 0
  %689 = vmatpush2.bf16.msra.mxu0 0
  %690 = vmatprep.subr.bf16.mxu0 0
  %691 = vmatpush2.bf16.msra.mxu0 0
  %692 = vmatprep.subr.bf16.mxu0 0
  %693 = vmatpush2.bf16.msra.mxu0 0
  %694 = vmatprep.subr.bf16.mxu0 0
  %695 = vmatpush2.bf16.msra.mxu0 0
  %696 = vmatprep.subr.bf16.mxu0 0
  %697 = vmatpush2.bf16.msra.mxu0 0
  %698 = vmatprep.subr.bf16.mxu0 0
  %699 = vmatpush2.bf16.msra.mxu0 0
  %700 = vmatprep.subr.bf16.mxu0 0
  %701 = vmatpush2.bf16.msra.mxu0 0
  %702 = vmatprep.mubr.bf16.mxu0 0
  %703 = vmatmul.mubr.bf16.gmra.mxu0 %v668
  %v704 = vpop.f32.mrf.mxu0
  %v705 = vadd.f32 0.0, %v704
  %v706 = vpop.f32.mrf.mxu0
  %v707 = vadd.f32 0.0, %v706
  %v708 = vpop.f32.mrf.mxu0
  %v709 = vpop.f32.mrf.mxu0
  %710 = vdwg.mxu0
  %v711 = vadd.f32 %v664, %v705
  %v712 = vadd.f32 %v665, %v707
  %v713 = vxor.u32 %v711, 2147483648
  %v714 = vxor.u32 %v712, 2147483648
  %v715 = vmul.f32 %v713, 1.442695
  %v716 = vpow.pop %v715
  %v717 = vmul.f32 %v714, 1.442695
  %v718 = vpow.pop %v717
  %v719 = vadd.f32 %v716, 1.0
  %v720 = vadd.f32 %v718, 1.0
  %v721 = vrcp.pop %v719
  %v722 = vmul.f32 1.0, %v721
  %v723 = vrcp.pop %v720
  %v724 = vmul.f32 1.0, %v723
  %v725 = vtanh.pop %v712
  %v726 = vmul.f32 %v722, %v654
  %728 = vrot.lane.b32.xlu0 %v725, 64
  %v729 = vpop.permute.xlu0 %728
  %v731 = vmul.f32 %v722, %v729
  %733 = vrot.lane.b32.xlu0 %v731, 64
  %v734 = vpop.permute.xlu0 %733
  %v736 = vadd.f32 %v726, %v734
  %v737 = vtanh.pop %v736
  %739 = vrot.lane.b32.xlu0 %v737, 64
  %v740 = vpop.permute.xlu0 %739
  %v742 = vmul.f32 %v724, %v740
  %s743 = smul.u32 6, 2
  %s744 = smul.addr %s743, 8
  %s745 = scalar_lea.vmem [#allocation2], %s744
  %v746 = vld [vmem:[%s745] sm:$0xff]
  %v747 = vld [vmem:[%s745 + $0x8] sm:$0xff]
  %v748 = vpack.c.bf16 %v742, %v742
  %v750 = vsel %vm252, %v748, 0
  %752 = vmatprep.subr.bf16.mxu0 0
  %753 = vmatpush1.bf16.msra.mxu0 0
  %754 = vmatprep.subr.bf16.mxu0 0
  %755 = vmatpush1.bf16.msra.mxu0 0
  %756 = vmatprep.subr.bf16.mxu0 0
  %757 = vmatpush1.bf16.msra.mxu0 0
  %758 = vmatprep.subr.bf16.mxu0 0
  %759 = vmatpush1.bf16.msra.mxu0 0
  %760 = vmatprep.subr.bf16.mxu0 %v243
  %761 = vmatpush1.bf16.msra.mxu0 %v242
  %762 = vmatprep.subr.bf16.mxu0 %v241
  %763 = vmatpush1.bf16.msra.mxu0 %v240
  %764 = vmatprep.subr.bf16.mxu0 %v239
  %765 = vmatpush1.bf16.msra.mxu0 %v238
  %766 = vmatprep.subr.bf16.mxu0 %v237
  %767 = vmatpush1.bf16.msra.mxu0 %v236
  %768 = vmatprep.subr.bf16.mxu0 0
  %769 = vmatpush2.bf16.msra.mxu0 0
  %770 = vmatprep.subr.bf16.mxu0 0
  %771 = vmatpush2.bf16.msra.mxu0 0
  %772 = vmatprep.subr.bf16.mxu0 0
  %773 = vmatpush2.bf16.msra.mxu0 0
  %774 = vmatprep.subr.bf16.mxu0 0
  %775 = vmatpush2.bf16.msra.mxu0 0
  %776 = vmatprep.subr.bf16.mxu0 0
  %777 = vmatpush2.bf16.msra.mxu0 0
  %778 = vmatprep.subr.bf16.mxu0 0
  %779 = vmatpush2.bf16.msra.mxu0 0
  %780 = vmatprep.subr.bf16.mxu0 0
  %781 = vmatpush2.bf16.msra.mxu0 0
  %782 = vmatprep.subr.bf16.mxu0 0
  %783 = vmatpush2.bf16.msra.mxu0 0
  %784 = vmatprep.mubr.bf16.mxu0 0
  %785 = vmatmul.mubr.bf16.gmra.mxu0 %v750
  %v786 = vpop.f32.mrf.mxu0
  %v787 = vadd.f32 0.0, %v786
  %v788 = vpop.f32.mrf.mxu0
  %v789 = vadd.f32 0.0, %v788
  %v790 = vpop.f32.mrf.mxu0
  %v791 = vpop.f32.mrf.mxu0
  %792 = vdwg.mxu0
  %v793 = vadd.f32 %v746, %v787
  %v794 = vadd.f32 %v747, %v789
  %v795 = vxor.u32 %v793, 2147483648
  %v796 = vxor.u32 %v794, 2147483648
  %v797 = vmul.f32 %v795, 1.442695
  %v798 = vpow.pop %v797
  %v799 = vmul.f32 %v796, 1.442695
  %v800 = vpow.pop %v799
  %v801 = vadd.f32 %v798, 1.0
  %v802 = vadd.f32 %v800, 1.0
  %v803 = vrcp.pop %v801
  %v804 = vmul.f32 1.0, %v803
  %v805 = vrcp.pop %v802
  %v806 = vmul.f32 1.0, %v805
  %v807 = vtanh.pop %v794
  %v808 = vmul.f32 %v804, %v736
  %810 = vrot.lane.b32.xlu0 %v807, 64
  %v811 = vpop.permute.xlu0 %810
  %v813 = vmul.f32 %v804, %v811
  %815 = vrot.lane.b32.xlu0 %v813, 64
  %v816 = vpop.permute.xlu0 %815
  %v818 = vadd.f32 %v808, %v816
  %v819 = vtanh.pop %v818
  %821 = vrot.lane.b32.xlu0 %v819, 64
  %v822 = vpop.permute.xlu0 %821
  %v824 = vmul.f32 %v806, %v822
  %s825 = smul.u32 7, 2
  %s826 = smul.addr %s825, 8
  %s827 = scalar_lea.vmem [#allocation2], %s826
  %v828 = vld [vmem:[%s827] sm:$0xff]
  %v829 = vld [vmem:[%s827 + $0x8] sm:$0xff]
  %v830 = vpack.c.bf16 %v824, %v824
  %v832 = vsel %vm252, %v830, 0
  %834 = vmatprep.subr.bf16.mxu0 0
  %835 = vmatpush1.bf16.msra.mxu0 0
  %836 = vmatprep.subr.bf16.mxu0 0
  %837 = vmatpush1.bf16.msra.mxu0 0
  %838 = vmatprep.subr.bf16.mxu0 0
  %839 = vmatpush1.bf16.msra.mxu0 0
  %840 = vmatprep.subr.bf16.mxu0 0
  %841 = vmatpush1.bf16.msra.mxu0 0
  %842 = vmatprep.subr.bf16.mxu0 %v243
  %843 = vmatpush1.bf16.msra.mxu0 %v242
  %844 = vmatprep.subr.bf16.mxu0 %v241
  %845 = vmatpush1.bf16.msra.mxu0 %v240
  %846 = vmatprep.subr.bf16.mxu0 %v239
  %847 = vmatpush1.bf16.msra.mxu0 %v238
  %848 = vmatprep.subr.bf16.mxu0 %v237
  %849 = vmatpush1.bf16.msra.mxu0 %v236
  %850 = vmatprep.subr.bf16.mxu0 0
  %851 = vmatpush2.bf16.msra.mxu0 0
  %852 = vmatprep.subr.bf16.mxu0 0
  %853 = vmatpush2.bf16.msra.mxu0 0
  %854 = vmatprep.subr.bf16.mxu0 0
  %855 = vmatpush2.bf16.msra.mxu0 0
  %856 = vmatprep.subr.bf16.mxu0 0
  %857 = vmatpush2.bf16.msra.mxu0 0
  %858 = vmatprep.subr.bf16.mxu0 0
  %859 = vmatpush2.bf16.msra.mxu0 0
  %860 = vmatprep.subr.bf16.mxu0 0
  %861 = vmatpush2.bf16.msra.mxu0 0
  %862 = vmatprep.subr.bf16.mxu0 0
  %863 = vmatpush2.bf16.msra.mxu0 0
  %864 = vmatprep.subr.bf16.mxu0 0
  %865 = vmatpush2.bf16.msra.mxu0 0
  %866 = vmatprep.mubr.bf16.mxu0 0
  %867 = vmatmul.mubr.bf16.gmra.mxu0 %v832
  %v868 = vpop.f32.mrf.mxu0
  %v869 = vadd.f32 0.0, %v868
  %v870 = vpop.f32.mrf.mxu0
  %v871 = vadd.f32 0.0, %v870
  %v872 = vpop.f32.mrf.mxu0
  %v873 = vpop.f32.mrf.mxu0
  %874 = vdwg.mxu0
  %v875 = vadd.f32 %v828, %v869
  %v876 = vadd.f32 %v829, %v871
  %v877 = vxor.u32 %v875, 2147483648
  %v878 = vxor.u32 %v876, 2147483648
  %v879 = vmul.f32 %v877, 1.442695
  %v880 = vpow.pop %v879
  %v881 = vmul.f32 %v878, 1.442695
  %v882 = vpow.pop %v881
  %v883 = vadd.f32 %v880, 1.0
  %v884 = vadd.f32 %v882, 1.0
  %v885 = vrcp.pop %v883
  %v886 = vmul.f32 1.0, %v885
  %v887 = vrcp.pop %v884
  %v888 = vmul.f32 1.0, %v887
  %v889 = vtanh.pop %v876
  %v890 = vmul.f32 %v886, %v818
  %892 = vrot.lane.b32.xlu0 %v889, 64
  %v893 = vpop.permute.xlu0 %892
  %v895 = vmul.f32 %v886, %v893
  %897 = vrot.lane.b32.xlu0 %v895, 64
  %v898 = vpop.permute.xlu0 %897
  %v900 = vadd.f32 %v890, %v898
  %v901 = vtanh.pop %v900
  %903 = vrot.lane.b32.xlu0 %v901, 64
  %v904 = vpop.permute.xlu0 %903
  %v906 = vmul.f32 %v888, %v904
  %v907 = vld [vmem:[%s6] sm:$0xff]
  %v908 = vld [vmem:[%s6 + $0x8] sm:$0xff]
  %vm909 = vcmask 64512
  %v911 = vsel %vm909, %v907, 0
  %v914 = vsel %vm909, %v908, 0
  %916 = vmatprep.subr.mxu0 0.0
  %917 = vmatpush1.msra.mxu0 0.0
  %918 = vmatprep.subr.mxu0 0.0
  %919 = vmatpush1.msra.mxu0 0.0
  %920 = vmatprep.subr.mxu0 0.0
  %921 = vmatpush1.msra.mxu0 0.0
  %922 = vmatprep.subr.mxu0 0.0
  %923 = vmatpush1.msra.mxu0 0.0
  %924 = vmatprep.subr.mxu0 0.0
  %925 = vmatpush1.msra.mxu0 0.0
  %926 = vmatprep.subr.mxu0 0.0
  %927 = vmatpush1.msra.mxu0 0.0
  %928 = vmatprep.subr.mxu0 0.0
  %929 = vmatpush1.msra.mxu0 0.0
  %930 = vmatprep.subr.mxu0 0.0
  %931 = vmatpush1.msra.mxu0 0.0
  %932 = vmatprep.subr.mxu0 0.0
  %933 = vmatpush1.msra.mxu0 0.0
  %934 = vmatprep.subr.mxu0 0.0
  %935 = vmatpush1.msra.mxu0 0.0
  %936 = vmatprep.subr.mxu0 0.0
  %937 = vmatpush1.msra.mxu0 0.0
  %938 = vmatprep.subr.mxu0 0.0
  %939 = vmatpush1.msra.mxu0 0.0
  %940 = vmatprep.subr.mxu0 0.0
  %941 = vmatpush1.msra.mxu0 0.0
  %942 = vmatprep.subr.mxu0 0.0
  %943 = vmatpush1.msra.mxu0 0.0
  %944 = vmatprep.subr.mxu0 0.0
  %945 = vmatpush1.msra.mxu0 0.0
  %946 = vmatprep.subr.mxu0 0.0
  %947 = vmatpush1.msra.mxu0 %v906
  %948 = vmatprep.subr.mxu0 0.0
  %949 = vmatpush2.msra.mxu0 0.0
  %950 = vmatprep.subr.mxu0 0.0
  %951 = vmatpush2.msra.mxu0 0.0
  %952 = vmatprep.subr.mxu0 0.0
  %953 = vmatpush2.msra.mxu0 0.0
  %954 = vmatprep.subr.mxu0 0.0
  %955 = vmatpush2.msra.mxu0 0.0
  %956 = vmatprep.subr.mxu0 0.0
  %957 = vmatpush2.msra.mxu0 0.0
  %958 = vmatprep.subr.mxu0 0.0
  %959 = vmatpush2.msra.mxu0 0.0
  %960 = vmatprep.subr.mxu0 0.0
  %961 = vmatpush2.msra.mxu0 0.0
  %962 = vmatprep.subr.mxu0 0.0
  %963 = vmatpush2.msra.mxu0 0.0
  %964 = vmatprep.subr.mxu0 0.0
  %965 = vmatpush2.msra.mxu0 0.0
  %966 = vmatprep.subr.mxu0 0.0
  %967 = vmatpush2.msra.mxu0 0.0
  %968 = vmatprep.subr.mxu0 0.0
  %969 = vmatpush2.msra.mxu0 0.0
  %970 = vmatprep.subr.mxu0 0.0
  %971 = vmatpush2.msra.mxu0 0.0
  %972 = vmatprep.subr.mxu0 0.0
  %973 = vmatpush2.msra.mxu0 0.0
  %974 = vmatprep.subr.mxu0 0.0
  %975 = vmatpush2.msra.mxu0 0.0
  %976 = vmatprep.subr.mxu0 0.0
  %977 = vmatpush2.msra.mxu0 0.0
  %978 = vmatprep.subr.mxu0 0.0
  %979 = vmatpush2.msra.mxu0 0.0
  %980 = vmatprep.mubr.f32.mxu0 0.0
  %981 = vmatmul.mubr.f32.gmra.mxu0 %v911
  %v982 = vpop.f32.mrf.mxu0
  %v983 = vadd.f32 0.0, %v982
  %v984 = vpop.f32.mrf.mxu0
  %985 = vmatprep.mubr.f32.mxu0 0.0
  %986 = vmatmul.mubr.f32.gmra.mxu0 %v914
  %v987 = vpop.f32.mrf.mxu0
  %v988 = vadd.f32 0.0, %v987
  %v989 = vpop.f32.mrf.mxu0
  %990 = vdwg.mxu0
  %v991 = vlaneseq
  %v992 = vshrl.u32 %v991, 7
  %vm993 = vcmp.lt.s32.totalorder %v992, 4
  %v994 = vsel %vm993, 1, 0
  %vm995 = vcmp.eq.s32.totalorder %v994, 1
  %997 = vrot.lane.b32.xlu0 %v983, 96
  %v998 = vpop.permute.xlu0 %997
  %v1000 = vsel %vm995, %v983, %v998
  %1002 = vrot.lane.b32.xlu0 %v988, 96
  %v1003 = vpop.permute.xlu0 %1002
  %v1005 = vsel %vm995, %v988, %v1003
  %1007 = vrot.lane.b32.xlu0 %v1005, 32
  %v1008 = vpop.permute.xlu0 %1007
  %v1010 = vsel %vm94, %v1000, %v1008
  %v1011 = vld [vmem:[%s7] sm:$0xff]
  %v1012 = vld [vmem:[%s7 + $0x8] sm:$0xff]
  %v1013 = vld [vmem:[%s7 + $0x10] sm:$0xff]
  %v1014 = vld [vmem:[%s7 + $0x18] sm:$0xff]
  %v1015 = vld [vmem:[%s7 + $0x20] sm:$0xff]
  %v1016 = vld [vmem:[%s7 + $0x28] sm:$0xff]
  %v1017 = vld [vmem:[%s7 + $0x30] sm:$0xff]
  %v1018 = vld [vmem:[%s7 + $0x38] sm:$0xff]
  %v1020 = vsel %vm252, %v1010, 0
  %1022 = vmatprep.subr.mxu0 0.0
  %1023 = vmatpush1.msra.mxu0 0.0
  %1024 = vmatprep.subr.mxu0 0.0
  %1025 = vmatpush1.msra.mxu0 0.0
  %1026 = vmatprep.subr.mxu0 0.0
  %1027 = vmatpush1.msra.mxu0 0.0
  %1028 = vmatprep.subr.mxu0 0.0
  %1029 = vmatpush1.msra.mxu0 0.0
  %1030 = vmatprep.subr.mxu0 0.0
  %1031 = vmatpush1.msra.mxu0 0.0
  %1032 = vmatprep.subr.mxu0 0.0
  %1033 = vmatpush1.msra.mxu0 0.0
  %1034 = vmatprep.subr.mxu0 0.0
  %1035 = vmatpush1.msra.mxu0 0.0
  %1036 = vmatprep.subr.mxu0 0.0
  %1037 = vmatpush1.msra.mxu0 0.0
  %1038 = vmatprep.subr.mxu0 0.0
  %1039 = vmatpush1.msra.mxu0 %v1018
  %1040 = vmatprep.subr.mxu0 0.0
  %1041 = vmatpush1.msra.mxu0 %v1017
  %1042 = vmatprep.subr.mxu0 0.0
  %1043 = vmatpush1.msra.mxu0 %v1016
  %1044 = vmatprep.subr.mxu0 0.0
  %1045 = vmatpush1.msra.mxu0 %v1015
  %1046 = vmatprep.subr.mxu0 0.0
  %1047 = vmatpush1.msra.mxu0 %v1014
  %1048 = vmatprep.subr.mxu0 0.0
  %1049 = vmatpush1.msra.mxu0 %v1013
  %1050 = vmatprep.subr.mxu0 0.0
  %1051 = vmatpush1.msra.mxu0 %v1012
  %1052 = vmatprep.subr.mxu0 0.0
  %1053 = vmatpush1.msra.mxu0 %v1011
  %1054 = vmatprep.subr.mxu0 0.0
  %1055 = vmatpush2.msra.mxu0 0.0
  %1056 = vmatprep.subr.mxu0 0.0
  %1057 = vmatpush2.msra.mxu0 0.0
  %1058 = vmatprep.subr.mxu0 0.0
  %1059 = vmatpush2.msra.mxu0 0.0
  %1060 = vmatprep.subr.mxu0 0.0
  %1061 = vmatpush2.msra.mxu0 0.0
  %1062 = vmatprep.subr.mxu0 0.0
  %1063 = vmatpush2.msra.mxu0 0.0
  %1064 = vmatprep.subr.mxu0 0.0
  %1065 = vmatpush2.msra.mxu0 0.0
  %1066 = vmatprep.subr.mxu0 0.0
  %1067 = vmatpush2.msra.mxu0 0.0
  %1068 = vmatprep.subr.mxu0 0.0
  %1069 = vmatpush2.msra.mxu0 0.0
  %1070 = vmatprep.subr.mxu0 0.0
  %1071 = vmatpush2.msra.mxu0 0.0
  %1072 = vmatprep.subr.mxu0 0.0
  %1073 = vmatpush2.msra.mxu0 0.0
  %1074 = vmatprep.subr.mxu0 0.0
  %1075 = vmatpush2.msra.mxu0 0.0
  %1076 = vmatprep.subr.mxu0 0.0
  %1077 = vmatpush2.msra.mxu0 0.0
  %1078 = vmatprep.subr.mxu0 0.0
  %1079 = vmatpush2.msra.mxu0 0.0
  %1080 = vmatprep.subr.mxu0 0.0
  %1081 = vmatpush2.msra.mxu0 0.0
  %1082 = vmatprep.subr.mxu0 0.0
  %1083 = vmatpush2.msra.mxu0 0.0
  %1084 = vmatprep.subr.mxu0 0.0
  %1085 = vmatpush2.msra.mxu0 0.0
  %1086 = vmatprep.mubr.f32.mxu0 0.0
  %1087 = vmatmul.mubr.f32.gmra.mxu0 %v1020
  %v1088 = vpop.f32.mrf.mxu0
  %v1089 = vadd.f32 0.0, %v1088
  %v1090 = vpop.f32.mrf.mxu0
  %1091 = vdwg.mxu0
  %v1092 = vtanh.pop %v1089
  %vm1093 = vcmask 23552
  %1094 = vst.msk [vmem:[%s8] sm:$0xff] %vm1093, %v1092
  // Predicated region
  $region34: #{tpu_custom_call.1} parent=0 // pred_check
    _
  $region35: #{tpu_custom_call.1} parent=0 // pred_check_branch
    %1096 = sbr.rel (0) target = $region37
  $region36: #{tpu_custom_call.1} parent=0 // pred_region
    _
  $region37: #{tpu_custom_call.1} parent=0 // pred_fallthru
    _
  // Predicated region
  $region38: #{tpu_custom_call.1} parent=0 // pred_check
    _
  $region39: #{tpu_custom_call.1} parent=0 // pred_check_branch
    %1098 = sbr.rel (0) target = $region41
  $region40: #{tpu_custom_call.1} parent=0 // pred_region
    _
  $region41: #{tpu_custom_call.1} parent=0 // pred_fallthru
    _

</llo_original>
